<compile_context>
chip_gen: v5e
topology: v5e:2x2
jax: 0.10.0
libtpu: 0.0.40
codegen_flags: <defaults>
</compile_context>

<pallas_src>
import functools

import jax
import jax.numpy as jnp
from jax.experimental import pallas as pl
from jax.experimental.pallas import tpu as pltpu


_VMEM_LIMIT_BYTES = 32 * 1024 * 1024   # explicit scoped-VMEM cap, safe on v5e/v6e/v7x
_TILE_BUDGET_BYTES = 20 * 1024 * 1024  # what the per-step blocks may occupy


# ----------------------------------------------------------------------------- dropout (portable)
def _keep_mask(shape, seed_scalar, flat_row_base, d_model, dropout_p):
    """Counter-based hash PRNG (lowbias32).  No pltpu PRNG primitives -> works everywhere."""
    row = jax.lax.broadcasted_iota(jnp.int32, shape, 0)
    col = jax.lax.broadcasted_iota(jnp.int32, shape, 1)
    idx = (flat_row_base + row) * d_model + col                      # unique per output element
    x = idx.astype(jnp.uint32) ^ (seed_scalar.astype(jnp.uint32) * jnp.uint32(0x9E3779B9))
    x = (x ^ (x >> jnp.uint32(16))) * jnp.uint32(0x7FEB352D)
    x = (x ^ (x >> jnp.uint32(15))) * jnp.uint32(0x846CA68B)
    x = x ^ (x >> jnp.uint32(16))
    r24 = (x >> jnp.uint32(8)).astype(jnp.int32)                     # uniform in [0, 2^24)
    thresh = jnp.int32(int(round(float(dropout_p) * float(1 << 24))))
    return r24 >= thresh                                             # True = keep


def _apply_dropout(y, seed_scalar, flat_row_base, d_model, dropout_p):
    keep = _keep_mask(y.shape, seed_scalar, flat_row_base, d_model, dropout_p)
    scale = jnp.float32(1.0 / (1.0 - dropout_p))
    return jnp.where(keep, y * scale, jnp.float32(0.0))


# --------------------------------------------------------------------- path 1: resident table
def _embedding_resident_kernel(seed_ref, ids_ref, pos_ref, emb_ref, out_ref, *,
                               ts, seq_len, vocab_size, d_model,
                               dropout_p, training, batch_major):
    # seed_ref: (1,) SMEM   ids_ref: (TS, 1) VMEM   pos_ref: (TS, D)   emb_ref: (V, D) resident
    if batch_major:
        b, s = pl.program_id(0), pl.program_id(1)
    else:
        s, b = pl.program_id(0), pl.program_id(1)
    s_base = s * ts

    ids = jnp.clip(ids_ref[...], 0, vocab_size - 1)                              # (TS, 1) i32
    hot = ids == jax.lax.broadcasted_iota(jnp.int32, (ts, vocab_size), 1)        # (TS, V) bool
    onehot = hot.astype(jnp.float32).astype(emb_ref.dtype)
    rows = jnp.dot(onehot, emb_ref[...], preferred_element_type=jnp.float32)     # (TS, D) f32

    y = rows + pos_ref[...].astype(jnp.float32)
    if training and dropout_p > 0.0:
        y = _apply_dropout(y, seed_ref[0], b * seq_len + s_base, d_model, dropout_p)
    out_ref[...] = y.astype(out_ref.dtype)


# --------------------------------------------------------------------- path 2: HBM row gather
def _embedding_gather_kernel(ids_ref, seed_ref, pos_ref, emb_hbm, out_ref,
                             gather_buf, copy_sem, *, ts, seq_len, vocab_size,
                             dropout_p, training, batch_major, unroll):
    # ids_ref: (B, S) SMEM   seed_ref: (1,) SMEM   pos_ref: (TS, D) VMEM
    # emb_hbm: (V, D) HBM (pl.ANY)   gather_buf: (TS, D) VMEM scratch   copy_sem: DMA sem
    if batch_major:
        b, s = pl.program_id(0), pl.program_id(1)
    else:
        s, b = pl.program_id(0), pl.program_id(1)
    s_base = s * ts

    # Issue TS per-row HBM -> VMEM copies; unrolled so the scalar id read + descriptor push of
    # several rows can co-issue instead of one serial bundle per row.
    @pl.loop(0, ts // unroll)
    def _issue(i):
        base = i * unroll
        for j in range(unroll):                                   # static unroll
            r = base + j
            tok = jnp.clip(ids_ref[b, s_base + r], 0, vocab_size - 1)
            pltpu.make_async_copy(emb_hbm.at[pl.ds(tok, 1)],
                                  gather_buf.at[pl.ds(r, 1)],
                                  copy_sem).start()

    # Single aggregate wait: descriptor byte count (TS*D*itemsize) equals the sum of all row
    # copies signalled on copy_sem, so all rows have landed once this returns.
    pltpu.make_async_copy(gather_buf, gather_buf, copy_sem).wait()

    y = gather_buf[...].astype(jnp.float32) + pos_ref[...].astype(jnp.float32)
    if training and dropout_p > 0.0:
        y = _apply_dropout(y, seed_ref[0], b * seq_len + s_base, y.shape[-1], dropout_p)
    out_ref[...] = y.astype(out_ref.dtype)


# ----------------------------------------------------------------------------------- wrapper
def _pick_seq_tile(seq_len, d_model, itemsize, resident_vocab=0, max_tile=1024):
    """Largest sequence tile (multiple of 8) whose resident blocks fit the per-step VMEM budget."""
    budget = _TILE_BUDGET_BYTES - 2 * resident_vocab * d_model * itemsize  # minus resident table
    per_row = 5 * d_model * itemsize + 4 * resident_vocab   # gather/landing + 2x pos + 2x out (+onehot)
    cap = max(8, min(max_tile, budget // max(per_row, 1)))
    cap = max(8, cap - cap % 8)
    if seq_len <= cap:
        return seq_len
    ts = cap
    while ts >= 8:
        if seq_len % ts == 0:
            return ts
        ts -= 8
    return seq_len  # fall back to an untiled sequence axis


def transformer_embedding(x_ids, emb_weight, pos_table, *, dropout_p=0.0,
                          training=False, seed=0, force_gather=False):
    """x_ids: [B, S] int; emb_weight: [V, D]; pos_table: [max_len, D] -> [B, S, D] (emb dtype)."""
    B, S = x_ids.shape
    V, D = emb_weight.shape
    param_dtype = emb_weight.dtype
    itemsize = jnp.dtype(param_dtype).itemsize

    # Small-vocab fast path: table fits comfortably in VMEM (double-buffered) -> keep it resident.
    resident = (not force_gather) and (V <= 4096) and (V * D * itemsize <= 4 * 1024 * 1024)

    TS = _pick_seq_tile(S, D, itemsize, resident_vocab=(V if resident else 0))
    num_s = S // TS
    # Sequence-major grid reuses the positional tile across the inner batch loop; if there is only
    # one sequence tile, lead with batch so the leading "parallel" axis has extent >= 2 (megacore).
    batch_major = num_s < 2
    grid = (B, num_s) if batch_major else (num_s, B)

    ids = x_ids.astype(jnp.int32)
    pos_slice = pos_table[:S, :].astype(param_dtype)       # PositionalEncoding.forward
    seed_arr = jnp.array([seed], dtype=jnp.int32)

    cparams = pltpu.CompilerParams(
        dimension_semantics=("parallel", "parallel"),
        vmem_limit_bytes=_VMEM_LIMIT_BYTES)
    out_shape = jax.ShapeDtypeStruct((B, S, D), param_dtype)

    if resident:
        if batch_major:
            ids_map = lambda b, s, seed: (b, s, 0)
            pos_map = lambda b, s, seed: (s, 0)
            out_map = lambda b, s, seed: (b, s, 0)
        else:
            ids_map = lambda s, b, seed: (b, s, 0)
            pos_map = lambda s, b, seed: (s, 0)
            out_map = lambda s, b, seed: (b, s, 0)
        emb_map = lambda *_: (0, 0)                          # constant block -> stays resident

        kernel = functools.partial(
            _embedding_resident_kernel, ts=TS, seq_len=S, vocab_size=V, d_model=D,
            dropout_p=float(dropout_p), training=bool(training), batch_major=batch_major)
        return pl.pallas_call(
            kernel,
            out_shape=out_shape,
            grid_spec=pltpu.PrefetchScalarGridSpec(
                num_scalar_prefetch=1,                       # dropout seed -> SMEM
                grid=grid,
                in_specs=[
                    pl.BlockSpec((None, TS, 1), ids_map),    # token ids as data
                    pl.BlockSpec((TS, D), pos_map),          # positional tile
                    pl.BlockSpec((V, D), emb_map),           # whole table resident in VMEM
                ],
                out_specs=pl.BlockSpec((None, TS, D), out_map)),
            compiler_params=cparams,
        )(seed_arr, ids.reshape(B, S, 1), pos_slice, emb_weight)

    # Large-vocab path: true HBM row gather driven by SMEM-prefetched ids.
    if batch_major:
        pos_map = lambda b, s, ids, seed: (s, 0)
        out_map = lambda b, s, ids, seed: (b, s, 0)
    else:
        pos_map = lambda s, b, ids, seed: (s, 0)
        out_map = lambda s, b, ids, seed: (b, s, 0)

    kernel = functools.partial(
        _embedding_gather_kernel, ts=TS, seq_len=S, vocab_size=V,
        dropout_p=float(dropout_p), training=bool(training), batch_major=batch_major,
        unroll=(4 if TS % 4 == 0 else 1))
    return pl.pallas_call(
        kernel,
        out_shape=out_shape,
        grid_spec=pltpu.PrefetchScalarGridSpec(
            num_scalar_prefetch=2,                           # token ids + dropout seed -> SMEM
            grid=grid,
            in_specs=[
                pl.BlockSpec((TS, D), pos_map),              # positional tile
                pl.BlockSpec(memory_space=pl.ANY),           # embedding table stays in HBM
            ],
            out_specs=pl.BlockSpec((None, TS, D), out_map),
            scratch_shapes=[
                pltpu.VMEM((TS, D), param_dtype),            # gathered-row landing buffer
                pltpu.SemaphoreType.DMA(()),                 # shared DMA semaphore
            ]),
        compiler_params=cparams,
    )(ids, seed_arr, pos_slice, emb_weight)


# ------------------------------------------------------------------- positional encoding (host)
def make_positional_encoding(max_len, d_model):
    pos = jnp.arange(max_len, dtype=jnp.float32)[:, None]              # (max_len, 1)
    even = jnp.arange(0, d_model, 2, dtype=jnp.float32)                # (d_model/2,)
    div = jnp.power(10000.0, even / d_model)
    angles = pos / div                                                  # (max_len, d_model/2)
    # encoding[:, 0::2] = sin, encoding[:, 1::2] = cos  -> interleave
    enc = jnp.stack([jnp.sin(angles), jnp.cos(angles)], axis=-1)
    return enc.reshape(max_len, d_model)


if __name__ == "__main__":
    vocab_size, max_len, d_model, dropout_p = 32, 16, 128, 0.1
    batch, seq_len = 2, 8

    key = jax.random.PRNGKey(0)
    k_emb, k_ids = jax.random.split(key)

    # nn.Embedding init: N(0,1) with the padding_idx=1 row zeroed.
    emb_weight = jax.random.normal(k_emb, (vocab_size, d_model), dtype=jnp.float32)
    emb_weight = emb_weight.at[1, :].set(0.0)
    pos_table = make_positional_encoding(max_len, d_model)

    x = jax.random.randint(k_ids, (batch, seq_len), 0, vocab_size, dtype=jnp.int32)

    # Pure-JAX reference.
    ref = emb_weight[x] + pos_table[:seq_len][None, :, :]

    # 1) eval mode, resident-table fast path (small vocab) — must match exactly.
    out = transformer_embedding(x, emb_weight, pos_table, dropout_p=dropout_p, training=False)
    out = jax.block_until_ready(out)
    assert out.shape == (batch, seq_len, d_model)
    assert jnp.allclose(out, ref, atol=1e-5, rtol=1e-5), "eval-mode (resident) mismatch"

    # 2) eval mode, forced HBM row-gather path (the large-vocab code path) — must match exactly.
    out_g = transformer_embedding(x, emb_weight, pos_table, dropout_p=dropout_p,
                                  training=False, force_gather=True)
    out_g = jax.block_until_ready(out_g)
    assert jnp.allclose(out_g, ref, atol=1e-5, rtol=1e-5), "eval-mode (gather) mismatch"

    # 3) training mode — every element is either ref/(1-p) (kept) or exactly 0 (dropped).
    out_tr = transformer_embedding(x, emb_weight, pos_table, dropout_p=dropout_p,
                                   training=True, seed=123)
    out_tr = jax.block_until_ready(out_tr)
    scaled = ref / (1.0 - dropout_p)
    ok = jnp.isclose(out_tr, scaled, atol=1e-5, rtol=1e-5) | jnp.isclose(out_tr, 0.0, atol=1e-6)
    assert bool(jnp.all(ok)), "training-mode dropout scaling mismatch"
    drop_frac = float(jnp.mean((out_tr == 0.0) & (jnp.abs(scaled) > 1e-6)))
    assert 0.0 < drop_frac < 0.3, f"dropout fraction {drop_frac} inconsistent with p={dropout_p}"

    # 4) bf16 parameters (halved HBM traffic) — loose tolerance vs the f32 reference.
    out_bf = transformer_embedding(x, emb_weight.astype(jnp.bfloat16),
                                   pos_table.astype(jnp.bfloat16),
                                   dropout_p=dropout_p, training=False)
    out_bf = jax.block_until_ready(out_bf)
    assert out_bf.dtype == jnp.bfloat16
    assert jnp.allclose(out_bf.astype(jnp.float32), ref, atol=8e-2, rtol=5e-2), "bf16 mismatch"

    print("KERNEL_OK")
</pallas_src>

<mosaic_0001>
module attributes {stable_mosaic.version = 11 : i64} {
  func.func @_embedding_resident_kernel(%arg0: i32, %arg1: i32, %arg2: memref<1xi32, #tpu.memory_space<smem>>, %arg3: memref<1x8x1xi32, #tpu.memory_space<vmem>>, %arg4: memref<8x128xf32, #tpu.memory_space<vmem>>, %arg5: memref<32x128xf32, #tpu.memory_space<vmem>>, %arg6: memref<1x8x128xf32, #tpu.memory_space<vmem>>) attributes {dimension_semantics = [#tpu.dimension_semantics<parallel>, #tpu.dimension_semantics<parallel>], iteration_bounds = array<i64: 2, 1>, scalar_prefetch = 1 : i64, scratch_operands = 0 : i64, tpu.core_type = #tpu.core_type<tc>, window_params = [{transform_indices = @transform_0, window_bounds = array<i64: 1, 8, 1>}, {transform_indices = @transform_1, window_bounds = array<i64: 8, 128>}, {pipeline_mode = #tpu.pipeline_mode<synchronous>, transform_indices = @transform_2, window_bounds = array<i64: 32, 128>}, {transform_indices = @transform_3, window_bounds = array<i64: 1, 8, 128>}]} {
    %c0 = arith.constant 0 : index
    %c0_0 = arith.constant 0 : index
    %c0_1 = arith.constant 0 : index
    %0 = vector.load %arg3[%c0, %c0_0, %c0_1] : memref<1x8x1xi32, #tpu.memory_space<vmem>>, vector<1x8x1xi32>
    %1 = vector.shape_cast %0 : vector<1x8x1xi32> to vector<8x1xi32>
    %c0_i32 = arith.constant 0 : i32
    %c31_i32 = arith.constant 31 : i32
    %2 = vector.broadcast %c0_i32 : i32 to vector<8x1xi32>
    %3 = arith.maxsi %2, %1 : vector<8x1xi32>
    %4 = vector.broadcast %c31_i32 : i32 to vector<8x1xi32>
    %5 = arith.minsi %4, %3 : vector<8x1xi32>
    %6 = tpu.iota {dimensions = array<i32: 1>} : vector<8x32xi32>
    %7 = vector.broadcast %5 : vector<8x1xi32> to vector<8x32xi32>
    %8 = arith.cmpi eq, %7, %6 : vector<8x32xi32>
    %9 = arith.extui %8 : vector<8x32xi1> to vector<8x32xi32>
    %10 = arith.sitofp %9 : vector<8x32xi32> to vector<8x32xf32>
    %c0_2 = arith.constant 0 : index
    %c0_3 = arith.constant 0 : index
    %11 = vector.load %arg5[%c0_2, %c0_3] : memref<32x128xf32, #tpu.memory_space<vmem>>, vector<32x128xf32>
    %cst = arith.constant dense<0.000000e+00> : vector<8x128xf32>
    %12 = tpu.matmul %10, %11, %cst {dimension_numbers = #tpu.dot_dimension_numbers<[1], [0], [0], [1], [0, 0, 1, 1], [], []>} : vector<8x32xf32>, vector<32x128xf32>, vector<8x128xf32> -> vector<8x128xf32>
    %c0_4 = arith.constant 0 : index
    %c0_5 = arith.constant 0 : index
    %13 = vector.load %arg4[%c0_4, %c0_5] : memref<8x128xf32, #tpu.memory_space<vmem>>, vector<8x128xf32>
    %14 = arith.addf %12, %13 : vector<8x128xf32>
    %c0_6 = arith.constant 0 : index
    %c0_7 = arith.constant 0 : index
    %c0_8 = arith.constant 0 : index
    %15 = vector.load %arg6[%c0_6, %c0_7, %c0_8] : memref<1x8x128xf32, #tpu.memory_space<vmem>>, vector<1x8x128xf32>
    %16 = vector.shape_cast %15 : vector<1x8x128xf32> to vector<8x128xf32>
    %17 = vector.shape_cast %14 : vector<8x128xf32> to vector<1x8x128xf32>
    tpu.vector_store %arg6[%c0_6, %c0_7, %c0_8], %17 {strides = array<i32>} : memref<1x8x128xf32, #tpu.memory_space<vmem>>, vector<1x8x128xf32>,
    return
  }
  func.func @transform_0(%arg0: i32, %arg1: i32, %arg2: memref<1xi32, #tpu.memory_space<smem>>) -> (i32, i32, i32) {
    %c0_i32 = arith.constant 0 : i32
    %c0_i32_0 = arith.constant 0 : i32
    return %arg0, %arg1, %c0_i32 : i32, i32, i32
  }
  func.func @transform_1(%arg0: i32, %arg1: i32, %arg2: memref<1xi32, #tpu.memory_space<smem>>) -> (i32, i32) {
    %c0_i32 = arith.constant 0 : i32
    %c0_i32_0 = arith.constant 0 : i32
    return %arg1, %c0_i32 : i32, i32
  }
  func.func @transform_2(%arg0: i32, %arg1: i32, %arg2: memref<1xi32, #tpu.memory_space<smem>>) -> (i32, i32) {
    %c0_i32 = arith.constant 0 : i32
    %c0_i32_0 = arith.constant 0 : i32
    %c0_i32_1 = arith.constant 0 : i32
    return %c0_i32, %c0_i32_0 : i32, i32
  }
  func.func @transform_3(%arg0: i32, %arg1: i32, %arg2: memref<1xi32, #tpu.memory_space<smem>>) -> (i32, i32, i32) {
    %c0_i32 = arith.constant 0 : i32
    %c0_i32_0 = arith.constant 0 : i32
    return %arg0, %arg1, %c0_i32 : i32, i32, i32
  }
}

</mosaic_0001>

<llo_original>
// kernel: tpu_custom_call.1
$region0: #{tpu_custom_call.1}
  #allocation0 [shape = 'u32[]', space=smem, size = 0x4, offset = 0x4, fixed_abs, tag = 'smem constant byte address 0x4 - core index']
  #allocation1 [shape = 'u32[72,128]{1,0:T(1,128)}', space=vmem, size = 0x9000, scoped, tag = 'internal scratch']
  #allocation2 [shape = 's32[1]{0}', space=sflag, size = 0x4, scoped, tag = 'scoped memory for tpu_custom_call.1']
  #allocation3 [shape = 's32[1]{0:T(128)S(6)}', space=smem, size = 0x200, scoped, tag = 'prefetched SMEM operand 0']
  %s0 = inlined_call_operand.<no memory space> [shape: s32[1], index: 0, kind: input, shape index: {}]
  %s1 = inlined_call_operand.vmem [shape: s32[2,8,1], index: 1, kind: input, shape index: {}]
  %s2 = inlined_call_operand.vmem [shape: f32[8,128], index: 2, kind: input, shape index: {}]
  %s3 = inlined_call_operand.hbm [shape: f32[32,128], index: 3, kind: input, shape index: {}]
  %s4 = inlined_call_operand.hbm [shape: f32[2,8,128], index: 4, kind: output, shape index: {}]
  %s5 = sld [smem:[#allocation0]]
  $region49: #{tpu_custom_call.1} parent=0
    _
  %s7 = ssub.s32 1, %s5
  %s8 = scalar_select 0, %s7, %s5
  %9 = sst [smem:[#allocation3]] %s0
  $region1: #{tpu_custom_call.1} parent=0
    #allocation4 [shape = 'u8[16384]{0}', space=vmem, size = 0x4000, scoped, tag = 'input window, operand 3, single buffered']
    #allocation5 [shape = 's32[2]{0}', space=sflag, size = 0x8, scoped, tag = 'scoped memory for tpu_custom_call.1']
    #allocation6 [shape = 's32[2]{0}', space=sflag, size = 0x8, scoped, tag = 'scoped memory for tpu_custom_call.1']
    #allocation7 [shape = 'u8[8192]{0}', space=vmem, size = 0x2000, scoped, tag = 'output window, operand 0']
    %10 = vsyncpa [#allocation5], 0
    %11 = vsyncpa [#allocation6], 0
    %s12 = scalar_lea.sflag [#allocation6], 1
    %13 = vsyncpa %s12, 0
    loop: start=0, step=1, limit=4
    $region2: #{tpu_custom_call.1} parent=1 // loop_pre_header
      _
    $region3: #{tpu_custom_call.1} parent=1 // loop_header
      %s15 = sphi 0, %s19
      %p16 = scmp.ge.s32.totalorder %s15, 4
      %s22 = sphi 0, %s34
      %s23 = sphi 0, %s30
      %s24 = sphi 0, %s22
      %s25 = sphi 0, %s23
      %s26 = sphi 0, %s24
      %s27 = sphi 0, %s25
      %s39 = sphi 0, %s41
      %s42 = sphi 0, %s39
      %s43 = sphi 0, %s42
      %s59 = sphi 0, %s43
      %s65 = sphi 0, %s67
      %s68 = sphi 0, %s65
      %s69 = sphi 0, %s68
      %s85 = sphi 0, %s69
      %s89 = sphi 0, %s89
      %s91 = sphi 0, %s89
      %s92 = sphi 0, %s91
      %s106 = sphi 0, %s92
      %s114 = sphi 0, %s116
      %s117 = sphi 0, %s114
      %s118 = sphi 0, %s117
      %s134 = sphi 0, %s118
    $region4: #{tpu_custom_call.1} parent=1 // loop_header_branch
      %18 = sbr.rel (%p16) target = $region8
    $region5: #{tpu_custom_call.1} parent=1 // loop_body
      %s20 = ssub.s32 %s15, 1
      %s21 = ssub.s32 %s15, 2
      %s28 = sadd.s32 1, %s23
      %p29 = scmp.ge.s32.totalorder %s28, 1
      %s30 = scalar_select %p29, 0, %s28
      %s31 = sadd.s32 1, %s22
      %s32 = scalar_select %p29, %s31, %s22
      %p33 = scmp.ge.s32.totalorder %s32, 2
      %s34 = scalar_select %p33, 0, %s32
      %s35 = ssub.s32 %s22, %s34
      %s36 = ssub.s32 %s23, %s30
      %s37 = sor.u32 %s35, %s36
      %p38 = scmp.eq.s32.totalorder %s37, 0
      %s40 = sadd.s32 %s39, 1
      %s41 = scalar_select %p38, %s39, %s40
      %p44 = pneg %p38
      %p45 = scmp.eq.s32.totalorder %s15, 1
      %p46 = por %p44, %p45
      %p47 = scmp.ne.s32.totalorder %s39, %s42
      %p48 = scmp.eq.s32.totalorder %s15, 0
      %p49 = por %p47, %p48
      %p50 = scmp.ne.s32.totalorder %s39, %s42
      %p51 = scmp.eq.s32.totalorder %s20, 1
      %p52 = por %p50, %p51
      %p53 = scmp.ne.s32.totalorder %s42, %s43
      %p54 = scmp.eq.s32.totalorder %s20, 0
      %p55 = por %p53, %p54
      %p56 = scmp.ne.s32.totalorder %s42, %s43
      %p57 = scmp.eq.s32.totalorder %s21, 1
      %p58 = por %p56, %p57
      %p60 = scmp.ne.s32.totalorder %s43, %s59
      %p61 = scmp.eq.s32.totalorder %s21, 0
      %p62 = por %p60, %p61
      %s63 = ssub.s32 %s23, %s30
      %p64 = scmp.eq.s32.totalorder %s63, 0
      %s66 = sadd.s32 %s65, 1
      %s67 = scalar_select %p64, %s65, %s66
      %p70 = pneg %p64
      %p71 = scmp.eq.s32.totalorder %s15, 1
      %p72 = por %p70, %p71
      %p73 = scmp.ne.s32.totalorder %s65, %s68
      %p74 = scmp.eq.s32.totalorder %s15, 0
      %p75 = por %p73, %p74
      %p76 = scmp.ne.s32.totalorder %s65, %s68
      %p77 = scmp.eq.s32.totalorder %s20, 1
      %p78 = por %p76, %p77
      %p79 = scmp.ne.s32.totalorder %s68, %s69
      %p80 = scmp.eq.s32.totalorder %s20, 0
      %p81 = por %p79, %p80
      %p82 = scmp.ne.s32.totalorder %s68, %s69
      %p83 = scmp.eq.s32.totalorder %s21, 1
      %p84 = por %p82, %p83
      %p86 = scmp.ne.s32.totalorder %s69, %s85
      %p87 = scmp.eq.s32.totalorder %s21, 0
      %p88 = por %p86, %p87
      %s90 = sadd.s32 %s89, 1
      %p93 = scmp.eq.s32.totalorder %s15, 1
      %p94 = scmp.ne.s32.totalorder %s89, %s91
      %p95 = scmp.eq.s32.totalorder %s15, 0
      %p96 = por %p94, %p95
      %p97 = scmp.ne.s32.totalorder %s89, %s91
      %p98 = scmp.eq.s32.totalorder %s20, 1
      %p99 = por %p97, %p98
      %p100 = scmp.ne.s32.totalorder %s91, %s92
      %p101 = scmp.eq.s32.totalorder %s20, 0
      %p102 = por %p100, %p101
      %p103 = scmp.ne.s32.totalorder %s91, %s92
      %p104 = scmp.eq.s32.totalorder %s21, 1
      %p105 = por %p103, %p104
      %p107 = scmp.ne.s32.totalorder %s92, %s106
      %p108 = scmp.eq.s32.totalorder %s21, 0
      %p109 = por %p107, %p108
      %s110 = ssub.s32 %s22, %s34
      %s111 = ssub.s32 %s23, %s30
      %s112 = sor.u32 %s110, %s111
      %p113 = scmp.eq.s32.totalorder %s112, 0
      %s115 = sadd.s32 %s114, 1
      %s116 = scalar_select %p113, %s114, %s115
      %p119 = pneg %p113
      %p120 = scmp.eq.s32.totalorder %s15, 1
      %p121 = por %p119, %p120
      %p122 = scmp.ne.s32.totalorder %s114, %s117
      %p123 = scmp.eq.s32.totalorder %s15, 0
      %p124 = por %p122, %p123
      %p125 = scmp.ne.s32.totalorder %s114, %s117
      %p126 = scmp.eq.s32.totalorder %s20, 1
      %p127 = por %p125, %p126
      %p128 = scmp.ne.s32.totalorder %s117, %s118
      %p129 = scmp.eq.s32.totalorder %s20, 0
      %p130 = por %p128, %p129
      %p131 = scmp.ne.s32.totalorder %s117, %s118
      %p132 = scmp.eq.s32.totalorder %s21, 1
      %p133 = por %p131, %p132
      %p135 = scmp.ne.s32.totalorder %s118, %s134
      %p136 = scmp.eq.s32.totalorder %s21, 0
      %p137 = por %p135, %p136
      %p138 = scmp.le.s32.totalorder 1, %s15
      %p139 = scmp.lt.s32.totalorder %s15, 3
      %p140 = pnand %p138, %p139
      %p141 = pneg %p140
      // Predicated region
      $region9: #{tpu_custom_call.1} parent=5 // pred_check
        _
      $region10: #{tpu_custom_call.1} parent=5 // pred_check_branch
        %143 = sbr.rel (%p140) target = $region12
      $region11: #{tpu_custom_call.1} parent=5 // pred_region
        %s144 = ssub.s32 %s15, 1
        // Predicated region
        $region13: #{tpu_custom_call.1} parent=11 // pred_check
          %p145 = pneg %p81
        $region14: #{tpu_custom_call.1} parent=11 // pred_check_branch
          %147 = sbr.rel (%p145) target = $region16
        $region15: #{tpu_custom_call.1} parent=11 // pred_region
          %p148 = scmp.lt.s32.totalorder %s25, 0
          %s149 = scalar_select %p148, %s25, 0
          %s150 = smul.addr %s149, 8
          %s151 = scalar_lea.vmem %s2, %s150
        $region16: #{tpu_custom_call.1} parent=11 // pred_fallthru
          _
        // Predicated region
        $region17: #{tpu_custom_call.1} parent=11 // pred_check
          %p152 = pneg %p102
        $region18: #{tpu_custom_call.1} parent=11 // pred_check_branch
          %154 = sbr.rel (%p152) target = $region20
        $region19: #{tpu_custom_call.1} parent=11 // pred_region
          %156 = vsyncadd [#allocation5], 0
          %s157 = sshll.u32 %s3, 4
          %s158 = int_to_ptr.hbm [resolvable:$true] %s157
          %s159 = sshll.u32 [#allocation4], 4
          %s160 = int_to_ptr.vmem [resolvable:$true] %s159
          %165 = dma.hbm_to_vmem [thread:$0]  %s158, 512, %s160, [#allocation5], 128, 128, 8
        $region20: #{tpu_custom_call.1} parent=11 // pred_fallthru
          _
      $region12: #{tpu_custom_call.1} parent=5 // pred_fallthru
        _
      %p166 = scmp.lt.s32.totalorder %s15, 2
      // Predicated region
      $region21: #{tpu_custom_call.1} parent=5 // pred_check
        %p167 = pneg %p166
      $region22: #{tpu_custom_call.1} parent=5 // pred_check_branch
        %169 = sbr.rel (%p167) target = $region24
      $region23: #{tpu_custom_call.1} parent=5 // pred_region
        // Predicated region
        $region25: #{tpu_custom_call.1} parent=23 // pred_check
          %p170 = pneg %p49
        $region26: #{tpu_custom_call.1} parent=23 // pred_check_branch
          %172 = sbr.rel (%p170) target = $region28
        $region27: #{tpu_custom_call.1} parent=23 // pred_region
          %p173 = scmp.lt.s32.totalorder %s22, 1
          %s174 = scalar_select %p173, %s22, 1
          %p175 = scmp.lt.s32.totalorder %s23, 0
          %s176 = scalar_select %p175, %s23, 0
          %s177 = sadd.s32 %s176, %s174
          %s178 = smul.addr %s177, 8
          %s179 = scalar_lea.vmem %s1, %s178
        $region28: #{tpu_custom_call.1} parent=23 // pred_fallthru
          _
      $region24: #{tpu_custom_call.1} parent=5 // pred_fallthru
        _
      %p180 = scmp.le.s32.totalorder 1, %s15
      %p181 = scmp.lt.s32.totalorder %s15, 3
      %p182 = pnand %p180, %p181
      %p183 = pneg %p182
      // Predicated region
      $region29: #{tpu_custom_call.1} parent=5 // pred_check
        _
      $region30: #{tpu_custom_call.1} parent=5 // pred_check_branch
        %185 = sbr.rel (%p182) target = $region32
      $region31: #{tpu_custom_call.1} parent=5 // pred_region
        %s186 = ssub.s32 %s15, 1
        // Predicated region
        $region33: #{tpu_custom_call.1} parent=31 // pred_check
          %p187 = pneg %p102
        $region34: #{tpu_custom_call.1} parent=31 // pred_check_branch
          %189 = sbr.rel (%p187) target = $region36
        $region35: #{tpu_custom_call.1} parent=31 // pred_region
          %191 = dma.done [#allocation5], 512
        $region36: #{tpu_custom_call.1} parent=31 // pred_fallthru
          _
        %p192 = scmp.lt.s32.totalorder %s24, 1
        %s193 = scalar_select %p192, %s24, 1
        %p194 = scmp.lt.s32.totalorder %s25, 0
        %s195 = scalar_select %p194, %s25, 0
        %s196 = sadd.s32 %s195, %s193
        %s197 = smul.addr %s196, 8
        %s198 = scalar_lea.vmem %s1, %s197
        %p199 = pneg %p55
        %p200 = pneg %p52
        %p201 = scmp.lt.s32.totalorder %s25, 0
        %s202 = scalar_select %p201, %s25, 0
        %s203 = smul.addr %s202, 8
        %s204 = scalar_lea.vmem %s2, %s203
        %p205 = pneg %p81
        %p206 = pneg %p78
        %p207 = pneg %p102
        %p208 = pneg %p99
        %p209 = pneg %p130
        %p210 = pneg %p127
        %s211 = sand.u32 %s117, 1
        %s212 = scalar_lea.sflag [#allocation6], %s211
        %s213 = sand.u32 %s117, 1
        %s214 = smul.addr %s213, 8
        %s215 = scalar_lea.vmem [#allocation7], %s214
        %p216 = scmp.lt.s32.totalorder %s24, 1
        %s217 = scalar_select %p216, %s24, 1
        %p218 = scmp.lt.s32.totalorder %s25, 0
        %s219 = scalar_select %p218, %s25, 0
        %s220 = sadd.s32 %s219, %s217
        %s221 = smul.addr %s220, 8
        %s222 = scalar_lea.vmem %s1, %s221
        %p223 = scmp.lt.s32.totalorder %s25, 0
        %s224 = scalar_select %p223, %s25, 0
        %s225 = smul.addr %s224, 8
        %s226 = scalar_lea.vmem %s2, %s225
        %v227 = vld [vmem:[%s222] sm:$0xff]
        %vm228 = vcmp.gt.s32.totalorder %v227, 0
        %v229 = vsel %vm228, %v227, 0
        %vm230 = vcmp.lt.s32.totalorder %v229, 31
        %v231 = vsel %vm230, %v229, 31
        %v232 = vlaneseq
        %v233 = vand.u32 %v232, 127
        %234 = vset.pattern.permute.xlu0 0
        %235 = vperm.xlu0 %234, %v231
        %v236 = vpop.permute.xlu0 %235
        %vm237 = vcmp.eq.s32.totalorder %v236, %v233
        %v238 = vsel %vm237, 1, 0
        %v239 = vcvt.s32.f32 %v238
        %v240 = vld [vmem:[#allocation4] sm:$0xff]
        %v241 = vld [vmem:[#allocation4 + $0x8] sm:$0xff]
        %v242 = vld [vmem:[#allocation4 + $0x10] sm:$0xff]
        %v243 = vld [vmem:[#allocation4 + $0x18] sm:$0xff]
        %v244 = vld [vmem:[%s226] sm:$0xff]
        %vm245 = vcmask 261120
        %v247 = vsel %vm245, %v239, 0
        %249 = vmatpush.msra.mxu0 0.0
        %250 = vmatpush.msra.mxu0 0.0
        %251 = vmatpush.msra.mxu0 0.0
        %252 = vmatpush.msra.mxu0 0.0
        %253 = vmatpush.msra.mxu0 0.0
        %254 = vmatpush.msra.mxu0 0.0
        %255 = vmatpush.msra.mxu0 0.0
        %256 = vmatpush.msra.mxu0 0.0
        %257 = vmatpush.msra.mxu0 0.0
        %258 = vmatpush.msra.mxu0 0.0
        %259 = vmatpush.msra.mxu0 0.0
        %260 = vmatpush.msra.mxu0 0.0
        %261 = vmatpush.msra.mxu0 %v243
        %262 = vmatpush.msra.mxu0 %v242
        %263 = vmatpush.msra.mxu0 %v241
        %264 = vmatpush.msra.mxu0 %v240
        %265 = vmatmul.f32.gmra.mxu0 %v247
        %v266 = vpop.f32.mrf.mxu0
        %v267 = vadd.f32 %v244, %v266
        %268 = vdwg.mxu0
        %269 = vst [vmem:[%s215] sm:$0xff] %v267
        %s270 = sand.u32 %s117, 1
        %s271 = scalar_lea.sflag [#allocation6], %s270
        %s272 = sand.u32 %s117, 1
        %s273 = smul.addr %s272, 8
        %s274 = scalar_lea.vmem [#allocation7], %s273
        // Predicated region
        $region37: #{tpu_custom_call.1} parent=31 // pred_check
          %p275 = pneg %p127
        $region38: #{tpu_custom_call.1} parent=31 // pred_check_branch
          %277 = sbr.rel (%p275) target = $region40
        $region39: #{tpu_custom_call.1} parent=31 // pred_region
          %279 = vsyncadd %s271, 0
          %s280 = sadd.s32 %s25, %s24
          %s281 = smul.addr %s280, 8
          %s282 = scalar_lea.hbm %s4, %s281
          %s284 = sshll.u32 %s274, 4
          %s285 = int_to_ptr.vmem [resolvable:$true] %s284
          %s286 = sshll.u32 %s282, 4
          %s287 = int_to_ptr.hbm [resolvable:$true] %s286
          %289 = dma.vmem_to_hbm [thread:$0]  %s285, 128, %s287, %s271
        $region40: #{tpu_custom_call.1} parent=31 // pred_fallthru
          _
      $region32: #{tpu_custom_call.1} parent=5 // pred_fallthru
        _
      %p290 = scmp.le.s32.totalorder 2, %s15
      // Predicated region
      $region41: #{tpu_custom_call.1} parent=5 // pred_check
        %p291 = pneg %p290
      $region42: #{tpu_custom_call.1} parent=5 // pred_check_branch
        %293 = sbr.rel (%p291) target = $region44
      $region43: #{tpu_custom_call.1} parent=5 // pred_region
        %s294 = ssub.s32 %s15, 2
        // Predicated region
        $region45: #{tpu_custom_call.1} parent=43 // pred_check
          %p295 = pneg %p133
        $region46: #{tpu_custom_call.1} parent=43 // pred_check_branch
          %297 = sbr.rel (%p295) target = $region48
        $region47: #{tpu_custom_call.1} parent=43 // pred_region
          %s298 = sand.u32 %s118, 1
          %s299 = scalar_lea.sflag [#allocation6], %s298
          %s300 = sand.u32 %s118, 1
          %s301 = smul.addr %s300, 8
          %s302 = scalar_lea.vmem [#allocation7], %s301
          %304 = dma.done %s299, 128
        $region48: #{tpu_custom_call.1} parent=43 // pred_fallthru
          _
      $region44: #{tpu_custom_call.1} parent=5 // pred_fallthru
        _
    $region6: #{tpu_custom_call.1} parent=1 // loop_footer
      %s19 = sadd.s32 1, %s15
    $region7: #{tpu_custom_call.1} parent=1 // loop_footer_branch
      %14 = sbr.rel target = $region3
    $region8: #{tpu_custom_call.1} parent=1 // loop_exit
      _
    %305 = vsyncpa [#allocation5], 1
    %s306 = scalar_lea.sflag [#allocation5], 1
    %307 = vsyncpa %s306, 1
    %308 = vsyncpa [#allocation6], 1
    %s309 = scalar_lea.sflag [#allocation6], 1
    %310 = vsyncpa %s309, 1

</llo_original>
